<compile_context>
chip_gen: v5e
topology: v5e:2x2
jax: 0.10.0
libtpu: 0.0.40
codegen_flags: <defaults>
</compile_context>

<pallas_src>
import functools

import jax
import jax.numpy as jnp
from jax.experimental import pallas as pl
from jax.experimental.pallas import tpu as pltpu

_SUBLANE = 8  # f32 vreg sublane count


def _round_up(n, m):
    return ((n + m - 1) // m) * m


def _pad_axis(a, axis, target):
    pad = target - a.shape[axis]
    if pad == 0:
        return a
    widths = [(0, 0)] * a.ndim
    widths[axis] = (0, pad)
    return jnp.pad(a, widths)


def mlp_kernel(x_ref, w1_ref, b1_ref, w2_ref, b2_ref, w3_ref, b3_ref, o_ref):
    # Layer 1: Linear + ReLU.  MXU matmul, f32 accumulation; epilogue in f32.
    x = x_ref[...].astype(w1_ref.dtype)
    h1 = jnp.dot(x, w1_ref[...], preferred_element_type=jnp.float32)
    h1 = jnp.maximum(h1 + b1_ref[...], 0.0)
    # Layer 2: Linear + ReLU (cast activation to weight dtype so bf16 MXU path is
    # used when weights are bf16; accumulation stays f32).
    h2 = jnp.dot(h1.astype(w2_ref.dtype), w2_ref[...],
                 preferred_element_type=jnp.float32)
    h2 = jnp.maximum(h2 + b2_ref[...], 0.0)
    # Layer 3: Linear (logits, no activation).
    logits = jnp.dot(h2.astype(w3_ref.dtype), w3_ref[...],
                     preferred_element_type=jnp.float32)
    o_ref[...] = (logits + b3_ref[...]).astype(o_ref.dtype)


@functools.partial(jax.jit, static_argnames=("block_rows", "compute_dtype"))
def mlp_forward(x, params, *, block_rows=16384, compute_dtype=jnp.float32):
    """x: (B, num_inputs).  params: dict of w1,b1,w2,b2,w3,b3 (f32, W as (in, out)).

    compute_dtype applies to the (tiny, VMEM-resident) weights only; x is streamed
    in its incoming dtype.  Accumulation and the bias/ReLU epilogue are always f32;
    output is f32.
    """
    w1, b1, w2, b2, w3, b3 = (params[k] for k in ("w1", "b1", "w2", "b2", "w3", "b3"))
    B, num_inputs = x.shape
    num_outputs = w3.shape[1]
    out_dtype = jnp.float32

    # --- zero-pad hidden dims only (exact): 30 -> 32, 20 -> 24.  Output stays 8. ---
    h1_dim = _round_up(w1.shape[1], _SUBLANE)
    h2_dim = _round_up(w2.shape[1], _SUBLANE)

    w1p = _pad_axis(w1, 1, h1_dim).astype(compute_dtype)
    b1p = _pad_axis(b1, 1, h1_dim)                                   # biases stay f32
    w2p = _pad_axis(_pad_axis(w2, 0, h1_dim), 1, h2_dim).astype(compute_dtype)
    b2p = _pad_axis(b2, 1, h2_dim)
    w3p = _pad_axis(w3, 0, h2_dim).astype(compute_dtype)
    b3p = b3

    # --- batch tiling: large row tiles, no wrapper padding, ragged last block. ---
    # Cap tm so the grid has >=2 steps when possible (lets v7x's 2 TCs both run),
    # but never below one sublane.
    tm = max(_SUBLANE, min(block_rows, _round_up(pl.cdiv(B, 2), _SUBLANE)))
    grid = (pl.cdiv(B, tm),)

    # VMEM/step at tm=16384 f32: x 2 MiB (x2 buf), out 0.5 MiB (x2 buf), h1/h2/logits
    # ~4 MiB, weights ~7 KiB -> ~10 MiB total, inside the 32 MiB scoped default and
    # v7x's 64 MiB, so no vmem_limit_bytes override is needed.
    const = lambda i: (0, 0)
    out = pl.pallas_call(
        mlp_kernel,
        out_shape=jax.ShapeDtypeStruct((B, num_outputs), out_dtype),
        grid_spec=pltpu.PrefetchScalarGridSpec(
            num_scalar_prefetch=0,
            grid=grid,
            in_specs=[
                pl.BlockSpec((tm, num_inputs), lambda i: (i, 0)),  # streamed x tile
                pl.BlockSpec((num_inputs, h1_dim), const),         # resident weights
                pl.BlockSpec((1, h1_dim), const),
                pl.BlockSpec((h1_dim, h2_dim), const),
                pl.BlockSpec((1, h2_dim), const),
                pl.BlockSpec((h2_dim, num_outputs), const),
                pl.BlockSpec((1, num_outputs), const),
            ],
            out_specs=pl.BlockSpec((tm, num_outputs), lambda i: (i, 0)),
        ),
        compiler_params=pltpu.CompilerParams(
            dimension_semantics=("parallel",),   # shard batch tiles across TCs (v7x)
        ),
    )(x, w1p, b1p, w2p, b2p, w3p, b3p)

    return out


def init_params(key, num_inputs, num_outputs):
    """Deterministic init mirroring torch.nn.Linear's U(-1/sqrt(fan_in), 1/sqrt(fan_in))."""
    dims = [(num_inputs, 30), (30, 20), (20, num_outputs)]
    params = {}
    keys = jax.random.split(key, 2 * len(dims))
    for i, (fan_in, fan_out) in enumerate(dims):
        bound = 1.0 / (fan_in ** 0.5)
        w = jax.random.uniform(keys[2 * i], (fan_in, fan_out), jnp.float32,
                               minval=-bound, maxval=bound)
        b = jax.random.uniform(keys[2 * i + 1], (1, fan_out), jnp.float32,
                               minval=-bound, maxval=bound)
        params[f"w{i + 1}"] = w
        params[f"b{i + 1}"] = b
    return params


if __name__ == "__main__":
    num_inputs, num_outputs, batch = 32, 8, 8

    key = jax.random.PRNGKey(0)
    k_params, k_x = jax.random.split(key)
    params = init_params(k_params, num_inputs, num_outputs)
    x = jax.random.normal(k_x, (batch, num_inputs), jnp.float32)

    # Plain-JAX reference (same math as the PyTorch module).
    h = jnp.maximum(x @ params["w1"] + params["b1"], 0.0)
    h = jnp.maximum(h @ params["w2"] + params["b2"], 0.0)
    ref = h @ params["w3"] + params["b3"]

    # f32 path: same forward semantics as the original module.
    out = jax.block_until_ready(mlp_forward(x, params))
    assert out.shape == (batch, num_outputs)
    assert jnp.allclose(out, ref, atol=1e-5, rtol=1e-5)

    # bf16 resident-weight path (f32 x stream, f32 accumulation) — loose tolerance.
    out_bf16 = jax.block_until_ready(
        mlp_forward(x, params, compute_dtype=jnp.bfloat16))
    assert jnp.allclose(out_bf16, ref, atol=5e-2, rtol=5e-2)

    # Ragged-batch path (B not a multiple of the tile) exercises the cdiv grid.
    x_odd = jax.random.normal(jax.random.PRNGKey(1), (batch + 5, num_inputs),
                              jnp.float32)
    h = jnp.maximum(x_odd @ params["w1"] + params["b1"], 0.0)
    h = jnp.maximum(h @ params["w2"] + params["b2"], 0.0)
    ref_odd = h @ params["w3"] + params["b3"]
    out_odd = jax.block_until_ready(mlp_forward(x_odd, params))
    assert out_odd.shape == (batch + 5, num_outputs)
    assert jnp.allclose(out_odd, ref_odd, atol=1e-5, rtol=1e-5)

    print("KERNEL_OK")
</pallas_src>

<mosaic_0001>
module attributes {stable_mosaic.version = 11 : i64} {
  func.func @mlp_kernel(%arg0: i32, %arg1: memref<8x32xf32, #tpu.memory_space<vmem>>, %arg2: memref<32x32xf32, #tpu.memory_space<vmem>>, %arg3: memref<1x32xf32, #tpu.memory_space<vmem>>, %arg4: memref<32x24xf32, #tpu.memory_space<vmem>>, %arg5: memref<1x24xf32, #tpu.memory_space<vmem>>, %arg6: memref<24x8xf32, #tpu.memory_space<vmem>>, %arg7: memref<1x8xf32, #tpu.memory_space<vmem>>, %arg8: memref<8x8xf32, #tpu.memory_space<vmem>>) attributes {dimension_semantics = [#tpu.dimension_semantics<parallel>], iteration_bounds = array<i64: 1>, scalar_prefetch = 0 : i64, scratch_operands = 0 : i64, tpu.core_type = #tpu.core_type<tc>, window_params = [{transform_indices = @transform_0, window_bounds = array<i64: 8, 32>}, {pipeline_mode = #tpu.pipeline_mode<synchronous>, transform_indices = @transform_1, window_bounds = array<i64: 32, 32>}, {pipeline_mode = #tpu.pipeline_mode<synchronous>, transform_indices = @transform_2, window_bounds = array<i64: 1, 32>}, {pipeline_mode = #tpu.pipeline_mode<synchronous>, transform_indices = @transform_3, window_bounds = array<i64: 32, 24>}, {pipeline_mode = #tpu.pipeline_mode<synchronous>, transform_indices = @transform_4, window_bounds = array<i64: 1, 24>}, {pipeline_mode = #tpu.pipeline_mode<synchronous>, transform_indices = @transform_5, window_bounds = array<i64: 24, 8>}, {pipeline_mode = #tpu.pipeline_mode<synchronous>, transform_indices = @transform_6, window_bounds = array<i64: 1, 8>}, {transform_indices = @transform_7, window_bounds = array<i64: 8, 8>}]} {
    %c0 = arith.constant 0 : index
    %c0_0 = arith.constant 0 : index
    %0 = vector.load %arg1[%c0, %c0_0] : memref<8x32xf32, #tpu.memory_space<vmem>>, vector<8x32xf32>
    %c0_1 = arith.constant 0 : index
    %c0_2 = arith.constant 0 : index
    %1 = vector.load %arg2[%c0_1, %c0_2] : memref<32x32xf32, #tpu.memory_space<vmem>>, vector<32x32xf32>
    %cst = arith.constant dense<0.000000e+00> : vector<8x32xf32>
    %2 = tpu.matmul %0, %1, %cst {dimension_numbers = #tpu.dot_dimension_numbers<[1], [0], [0], [1], [0, 0, 1, 1], [], []>} : vector<8x32xf32>, vector<32x32xf32>, vector<8x32xf32> -> vector<8x32xf32>
    %c0_3 = arith.constant 0 : index
    %c0_4 = arith.constant 0 : index
    %3 = vector.load %arg3[%c0_3, %c0_4] : memref<1x32xf32, #tpu.memory_space<vmem>>, vector<1x32xf32>
    %4 = vector.broadcast %3 : vector<1x32xf32> to vector<8x32xf32>
    %5 = arith.addf %2, %4 : vector<8x32xf32>
    %cst_5 = arith.constant 0.000000e+00 : f32
    %6 = vector.broadcast %cst_5 : f32 to vector<8x32xf32>
    %7 = arith.maximumf %5, %6 : vector<8x32xf32>
    %c0_6 = arith.constant 0 : index
    %c0_7 = arith.constant 0 : index
    %8 = vector.load %arg4[%c0_6, %c0_7] : memref<32x24xf32, #tpu.memory_space<vmem>>, vector<32x24xf32>
    %cst_8 = arith.constant dense<0.000000e+00> : vector<8x24xf32>
    %9 = tpu.matmul %7, %8, %cst_8 {dimension_numbers = #tpu.dot_dimension_numbers<[1], [0], [0], [1], [0, 0, 1, 1], [], []>} : vector<8x32xf32>, vector<32x24xf32>, vector<8x24xf32> -> vector<8x24xf32>
    %c0_9 = arith.constant 0 : index
    %c0_10 = arith.constant 0 : index
    %10 = vector.load %arg5[%c0_9, %c0_10] : memref<1x24xf32, #tpu.memory_space<vmem>>, vector<1x24xf32>
    %11 = vector.broadcast %10 : vector<1x24xf32> to vector<8x24xf32>
    %12 = arith.addf %9, %11 : vector<8x24xf32>
    %cst_11 = arith.constant 0.000000e+00 : f32
    %13 = vector.broadcast %cst_11 : f32 to vector<8x24xf32>
    %14 = arith.maximumf %12, %13 : vector<8x24xf32>
    %c0_12 = arith.constant 0 : index
    %c0_13 = arith.constant 0 : index
    %15 = vector.load %arg6[%c0_12, %c0_13] : memref<24x8xf32, #tpu.memory_space<vmem>>, vector<24x8xf32>
    %cst_14 = arith.constant dense<0.000000e+00> : vector<8x8xf32>
    %16 = tpu.matmul %14, %15, %cst_14 {dimension_numbers = #tpu.dot_dimension_numbers<[1], [0], [0], [1], [0, 0, 1, 1], [], []>} : vector<8x24xf32>, vector<24x8xf32>, vector<8x8xf32> -> vector<8x8xf32>
    %c0_15 = arith.constant 0 : index
    %c0_16 = arith.constant 0 : index
    %17 = vector.load %arg7[%c0_15, %c0_16] : memref<1x8xf32, #tpu.memory_space<vmem>>, vector<1x8xf32>
    %18 = vector.broadcast %17 : vector<1x8xf32> to vector<8x8xf32>
    %19 = arith.addf %16, %18 : vector<8x8xf32>
    %c0_17 = arith.constant 0 : index
    %c0_18 = arith.constant 0 : index
    %20 = vector.load %arg8[%c0_17, %c0_18] : memref<8x8xf32, #tpu.memory_space<vmem>>, vector<8x8xf32>
    tpu.vector_store %arg8[%c0_17, %c0_18], %19 {strides = array<i32>} : memref<8x8xf32, #tpu.memory_space<vmem>>, vector<8x8xf32>,
    return
  }
  func.func @transform_0(%arg0: i32) -> (i32, i32) {
    %c0_i32 = arith.constant 0 : i32
    %c0_i32_0 = arith.constant 0 : i32
    return %arg0, %c0_i32 : i32, i32
  }
  func.func @transform_1(%arg0: i32) -> (i32, i32) {
    %c0_i32 = arith.constant 0 : i32
    %c0_i32_0 = arith.constant 0 : i32
    %c0_i32_1 = arith.constant 0 : i32
    return %c0_i32, %c0_i32_0 : i32, i32
  }
  func.func @transform_2(%arg0: i32) -> (i32, i32) {
    %c0_i32 = arith.constant 0 : i32
    %c0_i32_0 = arith.constant 0 : i32
    %c0_i32_1 = arith.constant 0 : i32
    return %c0_i32, %c0_i32_0 : i32, i32
  }
  func.func @transform_3(%arg0: i32) -> (i32, i32) {
    %c0_i32 = arith.constant 0 : i32
    %c0_i32_0 = arith.constant 0 : i32
    %c0_i32_1 = arith.constant 0 : i32
    return %c0_i32, %c0_i32_0 : i32, i32
  }
  func.func @transform_4(%arg0: i32) -> (i32, i32) {
    %c0_i32 = arith.constant 0 : i32
    %c0_i32_0 = arith.constant 0 : i32
    %c0_i32_1 = arith.constant 0 : i32
    return %c0_i32, %c0_i32_0 : i32, i32
  }
  func.func @transform_5(%arg0: i32) -> (i32, i32) {
    %c0_i32 = arith.constant 0 : i32
    %c0_i32_0 = arith.constant 0 : i32
    %c0_i32_1 = arith.constant 0 : i32
    return %c0_i32, %c0_i32_0 : i32, i32
  }
  func.func @transform_6(%arg0: i32) -> (i32, i32) {
    %c0_i32 = arith.constant 0 : i32
    %c0_i32_0 = arith.constant 0 : i32
    %c0_i32_1 = arith.constant 0 : i32
    return %c0_i32, %c0_i32_0 : i32, i32
  }
  func.func @transform_7(%arg0: i32) -> (i32, i32) {
    %c0_i32 = arith.constant 0 : i32
    %c0_i32_0 = arith.constant 0 : i32
    return %arg0, %c0_i32 : i32, i32
  }
}

</mosaic_0001>

<llo_original>
// kernel: mlp_forward.1
$region0: #{mlp_forward.1}
  #allocation0 [shape = 'u32[]', space=smem, size = 0x4, offset = 0x4, fixed_abs, tag = 'smem constant byte address 0x4 - core index']
  #allocation1 [shape = 'u32[72,128]{1,0:T(1,128)}', space=vmem, size = 0x9000, scoped, tag = 'internal scratch']
  %s0 = inlined_call_operand.vmem [shape: f32[8,32], index: 0, kind: input, shape index: {}]
  %s1 = inlined_call_operand.vmem [shape: f32[32,32], index: 1, kind: input, shape index: {}]
  %s2 = inlined_call_operand.vmem [shape: f32[1,32], index: 2, kind: input, shape index: {}]
  %s3 = inlined_call_operand.vmem [shape: f32[32,24], index: 3, kind: input, shape index: {}]
  %s4 = inlined_call_operand.vmem [shape: f32[1,24], index: 4, kind: input, shape index: {}]
  %s5 = inlined_call_operand.vmem [shape: f32[24,8], index: 5, kind: input, shape index: {}]
  %s6 = inlined_call_operand.vmem [shape: f32[1,8], index: 6, kind: input, shape index: {}]
  %s7 = inlined_call_operand.hbm [shape: f32[8,8], index: 7, kind: output, shape index: {}]
  %s8 = sld [smem:[#allocation0]]
  $region38: #{mlp_forward.1} parent=0
    _
  %s10 = ssub.s32 1, %s8
  %s11 = scalar_select 0, %s10, %s8
  $region1: #{mlp_forward.1} parent=0
    #allocation2 [shape = 'u8[4096]{0}', space=vmem, size = 0x1000, scoped, tag = 'output window, operand 0, single buffered']
    #allocation3 [shape = 's32[1]{0}', space=sflag, size = 0x4, scoped, tag = 'scoped memory for mlp_forward.1']
    %12 = vsyncpa [#allocation3], 0
    // Predicated region
    $region2: #{mlp_forward.1} parent=1 // pred_check
      _
    $region3: #{mlp_forward.1} parent=1 // pred_check_branch
      %14 = sbr.rel (0) target = $region5
    $region4: #{mlp_forward.1} parent=1 // pred_region
      _
    $region5: #{mlp_forward.1} parent=1 // pred_fallthru
      _
    // Predicated region
    $region6: #{mlp_forward.1} parent=1 // pred_check
      _
    $region7: #{mlp_forward.1} parent=1 // pred_check_branch
      %16 = sbr.rel (0) target = $region9
    $region8: #{mlp_forward.1} parent=1 // pred_region
      _
    $region9: #{mlp_forward.1} parent=1 // pred_fallthru
      _
    // Predicated region
    $region10: #{mlp_forward.1} parent=1 // pred_check
      _
    $region11: #{mlp_forward.1} parent=1 // pred_check_branch
      %18 = sbr.rel (0) target = $region13
    $region12: #{mlp_forward.1} parent=1 // pred_region
      _
    $region13: #{mlp_forward.1} parent=1 // pred_fallthru
      _
    // Predicated region
    $region14: #{mlp_forward.1} parent=1 // pred_check
      _
    $region15: #{mlp_forward.1} parent=1 // pred_check_branch
      %20 = sbr.rel (0) target = $region17
    $region16: #{mlp_forward.1} parent=1 // pred_region
      _
    $region17: #{mlp_forward.1} parent=1 // pred_fallthru
      _
    // Predicated region
    $region18: #{mlp_forward.1} parent=1 // pred_check
      _
    $region19: #{mlp_forward.1} parent=1 // pred_check_branch
      %22 = sbr.rel (0) target = $region21
    $region20: #{mlp_forward.1} parent=1 // pred_region
      _
    $region21: #{mlp_forward.1} parent=1 // pred_fallthru
      _
    // Predicated region
    $region22: #{mlp_forward.1} parent=1 // pred_check
      _
    $region23: #{mlp_forward.1} parent=1 // pred_check_branch
      %24 = sbr.rel (0) target = $region25
    $region24: #{mlp_forward.1} parent=1 // pred_region
      _
    $region25: #{mlp_forward.1} parent=1 // pred_fallthru
      _
    // Predicated region
    $region26: #{mlp_forward.1} parent=1 // pred_check
      _
    $region27: #{mlp_forward.1} parent=1 // pred_check_branch
      %26 = sbr.rel (0) target = $region29
    $region28: #{mlp_forward.1} parent=1 // pred_region
      _
    $region29: #{mlp_forward.1} parent=1 // pred_fallthru
      _
    %v27 = vld [vmem:[%s0] sm:$0xff]
    %v28 = vld [vmem:[%s1] sm:$0xff]
    %v29 = vld [vmem:[%s1 + $0x8] sm:$0xff]
    %v30 = vld [vmem:[%s1 + $0x10] sm:$0xff]
    %v31 = vld [vmem:[%s1 + $0x18] sm:$0xff]
    %v32 = vld [vmem:[%s2] sm:$0x1]
    %v34 = vperm.slane %v32, 0
    %vm36 = vcmask 261120
    %v38 = vsel %vm36, %v27, 0
    %40 = vmatpush.msra.mxu0 0.0
    %41 = vmatpush.msra.mxu0 0.0
    %42 = vmatpush.msra.mxu0 0.0
    %43 = vmatpush.msra.mxu0 0.0
    %44 = vmatpush.msra.mxu0 0.0
    %45 = vmatpush.msra.mxu0 0.0
    %46 = vmatpush.msra.mxu0 0.0
    %47 = vmatpush.msra.mxu0 0.0
    %48 = vmatpush.msra.mxu0 0.0
    %49 = vmatpush.msra.mxu0 0.0
    %50 = vmatpush.msra.mxu0 0.0
    %51 = vmatpush.msra.mxu0 0.0
    %52 = vmatpush.msra.mxu0 %v31
    %53 = vmatpush.msra.mxu0 %v30
    %54 = vmatpush.msra.mxu0 %v29
    %55 = vmatpush.msra.mxu0 %v28
    %56 = vmatmul.f32.gmra.mxu0 %v38
    %v57 = vpop.f32.mrf.mxu0
    %v58 = vadd.f32 %v34, %v57
    %59 = vdwg.mxu0
    %v60 = vmax.f32 %v58, 0.0
    %v61 = vld [vmem:[%s3] sm:$0xff]
    %v62 = vld [vmem:[%s3 + $0x8] sm:$0xff]
    %v63 = vld [vmem:[%s3 + $0x10] sm:$0xff]
    %v64 = vld [vmem:[%s3 + $0x18] sm:$0xff]
    %v65 = vld [vmem:[%s4] sm:$0x1]
    %v67 = vperm.slane %v65, 0
    %v70 = vsel %vm36, %v60, 0
    %72 = vmatpush.msra.mxu0 0.0
    %73 = vmatpush.msra.mxu0 0.0
    %74 = vmatpush.msra.mxu0 0.0
    %75 = vmatpush.msra.mxu0 0.0
    %76 = vmatpush.msra.mxu0 0.0
    %77 = vmatpush.msra.mxu0 0.0
    %78 = vmatpush.msra.mxu0 0.0
    %79 = vmatpush.msra.mxu0 0.0
    %80 = vmatpush.msra.mxu0 0.0
    %81 = vmatpush.msra.mxu0 0.0
    %82 = vmatpush.msra.mxu0 0.0
    %83 = vmatpush.msra.mxu0 0.0
    %84 = vmatpush.msra.mxu0 %v64
    %85 = vmatpush.msra.mxu0 %v63
    %86 = vmatpush.msra.mxu0 %v62
    %87 = vmatpush.msra.mxu0 %v61
    %88 = vmatmul.f32.gmra.mxu0 %v70
    %v89 = vpop.f32.mrf.mxu0
    %v90 = vadd.f32 %v67, %v89
    %91 = vdwg.mxu0
    %v92 = vmax.f32 %v90, 0.0
    %v93 = vld [vmem:[%s5] sm:$0xff]
    %v94 = vld [vmem:[%s5 + $0x8] sm:$0xff]
    %v95 = vld [vmem:[%s5 + $0x10] sm:$0xff]
    %v96 = vld [vmem:[%s6] sm:$0x1]
    %v98 = vperm.slane %v96, 0
    %vm100 = vcmask 195584
    %v102 = vsel %vm100, %v92, 0
    %104 = vmatpush.msra.mxu0 0.0
    %105 = vmatpush.msra.mxu0 0.0
    %106 = vmatpush.msra.mxu0 0.0
    %107 = vmatpush.msra.mxu0 0.0
    %108 = vmatpush.msra.mxu0 0.0
    %109 = vmatpush.msra.mxu0 0.0
    %110 = vmatpush.msra.mxu0 0.0
    %111 = vmatpush.msra.mxu0 0.0
    %112 = vmatpush.msra.mxu0 0.0
    %113 = vmatpush.msra.mxu0 0.0
    %114 = vmatpush.msra.mxu0 0.0
    %115 = vmatpush.msra.mxu0 0.0
    %116 = vmatpush.msra.mxu0 0.0
    %117 = vmatpush.msra.mxu0 %v95
    %118 = vmatpush.msra.mxu0 %v94
    %119 = vmatpush.msra.mxu0 %v93
    %120 = vmatmul.f32.gmra.mxu0 %v102
    %v121 = vpop.f32.mrf.mxu0
    %v122 = vadd.f32 %v98, %v121
    %123 = vdwg.mxu0
    %vm124 = vcmask 64512
    %125 = vst.msk [vmem:[#allocation2] sm:$0xff] %vm124, %v122
    // Predicated region
    $region30: #{mlp_forward.1} parent=1 // pred_check
      _
    $region31: #{mlp_forward.1} parent=1 // pred_check_branch
      %127 = sbr.rel (0) target = $region33
    $region32: #{mlp_forward.1} parent=1 // pred_region
      %129 = vsyncadd [#allocation3], 0
      %s131 = sshll.u32 [#allocation2], 4
      %s132 = int_to_ptr.vmem [resolvable:$true] %s131
      %s133 = sshll.u32 %s7, 4
      %s134 = int_to_ptr.hbm [resolvable:$true] %s133
      %136 = dma.vmem_to_hbm [thread:$0]  %s132, 128, %s134, [#allocation3]
    $region33: #{mlp_forward.1} parent=1 // pred_fallthru
      _
    // Predicated region
    $region34: #{mlp_forward.1} parent=1 // pred_check
      _
    $region35: #{mlp_forward.1} parent=1 // pred_check_branch
      %138 = sbr.rel (0) target = $region37
    $region36: #{mlp_forward.1} parent=1 // pred_region
      %140 = dma.done [#allocation3], 128
    $region37: #{mlp_forward.1} parent=1 // pred_fallthru
      _
    %141 = vsyncpa [#allocation3], 1

</llo_original>
